<compile_context>
chip_gen: v7x
topology: tpu7x:2x2x1
jax: 0.10.0
libtpu: 0.0.40
codegen_flags: <defaults>
</compile_context>

<pallas_src>
import functools
import math

import jax
import jax.numpy as jnp
from jax.experimental import pallas as pl
from jax.experimental.pallas import tpu as pltpu


def _round_up(x, m):
  return pl.cdiv(x, m) * m


def _make_mlp_kernel(n_hidden, use_dropout):
  """Builds a fused MLP kernel for a fixed depth / dropout configuration."""

  def kernel(x_ref, w_in_ref, b_in_ref, *rest):
    idx = 0
    if n_hidden > 0:
      w_hid_ref = rest[idx]
      b_hid_ref = rest[idx + 1]
      idx += 2
    w_out_ref = rest[idx]
    b_out_ref = rest[idx + 1]
    idx += 2
    if use_dropout:
      mask_ref = rest[idx]
      idx += 1
    o_ref = rest[idx]

    # input layer
    h = jnp.dot(x_ref[...], w_in_ref[...],
                preferred_element_type=jnp.float32) + b_in_ref[...]
    if use_dropout:
      h = h * mask_ref[0]
    h = jnp.maximum(h, 0.0)  # nn.ReLU()

    # hidden layers (static unroll; n_hidden = mlp_depth - 2)
    for l in range(n_hidden):
      h = jnp.dot(h, w_hid_ref[l],
                  preferred_element_type=jnp.float32) + b_hid_ref[l]
      if use_dropout:
        h = h * mask_ref[l + 1]
      h = jnp.maximum(h, 0.0)

    # output layer (no activation / dropout)
    out = jnp.dot(h, w_out_ref[...],
                  preferred_element_type=jnp.float32) + b_out_ref[...]
    o_ref[...] = out.astype(o_ref.dtype)

  return kernel


def init_mlp_params(key, n_inputs, n_outputs, mlp_width, mlp_depth):
  """Deterministic PyTorch-style (uniform +-1/sqrt(fan_in)) init."""
  n_hidden = mlp_depth - 2
  keys = jax.random.split(key, 2 * (n_hidden + 2))

  def linear(kw, kb, fan_in, fan_out):
    bound = 1.0 / math.sqrt(fan_in)
    w = jax.random.uniform(kw, (fan_out, fan_in), jnp.float32, -bound, bound)
    b = jax.random.uniform(kb, (fan_out,), jnp.float32, -bound, bound)
    return w, b

  w_in, b_in = linear(keys[0], keys[1], n_inputs, mlp_width)
  w_hid, b_hid = [], []
  for l in range(n_hidden):
    w, b = linear(keys[2 + 2 * l], keys[3 + 2 * l], mlp_width, mlp_width)
    w_hid.append(w)
    b_hid.append(b)
  w_out, b_out = linear(keys[-2], keys[-1], mlp_width, n_outputs)
  return {
      "w_in": w_in, "b_in": b_in,
      "w_hid": jnp.stack(w_hid) if n_hidden > 0 else jnp.zeros(
          (0, mlp_width, mlp_width), jnp.float32),
      "b_hid": jnp.stack(b_hid) if n_hidden > 0 else jnp.zeros(
          (0, mlp_width), jnp.float32),
      "w_out": w_out, "b_out": b_out,
  }


def mlp_forward(x, params, *, dropout_p, train=True, seed=0, tb=512,
                weight_dtype=jnp.float32):
  """Pallas-backed MLP forward.  x: (B, n_inputs) float32."""
  B, n_in = x.shape
  W = params["w_in"].shape[0]
  n_out = params["w_out"].shape[0]
  n_hidden = params["w_hid"].shape[0]
  use_dropout = bool(train) and float(dropout_p) > 0.0
  n_layers_do = n_hidden + 1   # layers followed by dropout+act

  # ---- lane-dense padding of feature dims to multiples of 128 -------------
  n_in_p = _round_up(n_in, 128)
  W_p = _round_up(W, 128)
  n_out_p = _round_up(n_out, 128)

  # ---- batch tiling: large tile, pad B so the grid divides evenly ---------
  tb_eff = int(min(tb, _round_up(B, 8)))
  tb_eff = max(8, (tb_eff // 8) * 8)
  B_p = int(_round_up(B, tb_eff))

  x_p = jnp.pad(x, ((0, B_p - B), (0, n_in_p - n_in)))

  # Pre-transpose PyTorch (out, in) weights to (in, out) and zero-pad.
  w_in_t = jnp.pad(params["w_in"].T,
                   ((0, n_in_p - n_in), (0, W_p - W))).astype(weight_dtype)
  b_in_p = jnp.pad(params["b_in"], (0, W_p - W)).reshape(1, W_p)
  w_out_t = jnp.pad(params["w_out"].T,
                    ((0, W_p - W), (0, n_out_p - n_out))).astype(weight_dtype)
  b_out_p = jnp.pad(params["b_out"], (0, n_out_p - n_out)).reshape(1, n_out_p)
  if n_hidden > 0:
    w_hid_t = jnp.pad(jnp.transpose(params["w_hid"], (0, 2, 1)),
                      ((0, 0), (0, W_p - W), (0, W_p - W))).astype(weight_dtype)
    b_hid_p = jnp.pad(params["b_hid"],
                      ((0, 0), (0, W_p - W))).reshape(n_hidden, 1, W_p)

  # ---- dropout keep-masks (pre-scaled), PyTorch nn.Dropout semantics ------
  if use_dropout:
    key = jax.random.PRNGKey(seed)
    keep = jax.random.bernoulli(key, 1.0 - float(dropout_p),
                                (n_layers_do, B_p, W_p))
    masks = keep.astype(jnp.float32) * (1.0 / (1.0 - float(dropout_p)))

  # ---- specs / args --------------------------------------------------------
  in_specs = [
      pl.BlockSpec((tb_eff, n_in_p), lambda i: (i, 0)),      # x tile
      pl.BlockSpec((n_in_p, W_p), lambda i: (0, 0)),          # w_in^T
      pl.BlockSpec((1, W_p), lambda i: (0, 0)),               # b_in
  ]
  args = [x_p, w_in_t, b_in_p]
  if n_hidden > 0:
    in_specs += [
        pl.BlockSpec((n_hidden, W_p, W_p), lambda i: (0, 0, 0)),   # w_hid^T
        pl.BlockSpec((n_hidden, 1, W_p), lambda i: (0, 0, 0)),     # b_hid
    ]
    args += [w_hid_t, b_hid_p]
  in_specs += [
      pl.BlockSpec((W_p, n_out_p), lambda i: (0, 0)),          # w_out^T
      pl.BlockSpec((1, n_out_p), lambda i: (0, 0)),            # b_out
  ]
  args += [w_out_t, b_out_p]
  if use_dropout:
    in_specs += [pl.BlockSpec((n_layers_do, tb_eff, W_p),
                              lambda i: (0, i, 0))]            # dropout masks
    args += [masks]

  out_specs = pl.BlockSpec((tb_eff, n_out_p), lambda i: (i, 0))
  out_shape = jax.ShapeDtypeStruct((B_p, n_out_p), x.dtype)

  # ---- VMEM budget from actual footprint (double-buffered tiles) ----------
  bpe = 4
  weight_bytes = bpe * (n_in_p * W_p + W_p
                        + n_hidden * (W_p * W_p + W_p)
                        + W_p * n_out_p + n_out_p)
  tile_io_bytes = bpe * (tb_eff * n_in_p + tb_eff * n_out_p)
  if use_dropout:
    tile_io_bytes += bpe * n_layers_do * tb_eff * W_p
  scratch_bytes = bpe * tb_eff * W_p * 4          # headroom for intermediates
  vmem_limit = int(2 * weight_bytes + 2 * tile_io_bytes + scratch_bytes)
  vmem_limit = int(min(max(vmem_limit, 8 * 1024 * 1024), 64 * 1024 * 1024))

  kernel = _make_mlp_kernel(n_hidden, use_dropout)

  out = pl.pallas_call(
      kernel,
      out_shape=out_shape,
      grid=(B_p // tb_eff,),
      in_specs=in_specs,
      out_specs=out_specs,
      compiler_params=pltpu.CompilerParams(
          dimension_semantics=("parallel",),    # batch tiles are independent
          vmem_limit_bytes=vmem_limit),
  )(*args)

  return out[:B, :n_out]


def mlp_ref(x, params):
  """Pure-JAX reference (eval mode, train=False)."""
  h = x @ params["w_in"].T + params["b_in"]
  h = jnp.maximum(h, 0.0)
  for l in range(params["w_hid"].shape[0]):
    h = h @ params["w_hid"][l].T + params["b_hid"][l]
    h = jnp.maximum(h, 0.0)
  return h @ params["w_out"].T + params["b_out"]


if __name__ == "__main__":
  # Small shapes consistent with the module: MLP(n_inputs=32, n_outputs=16,
  # mlp_width=32, mlp_depth=4, mlp_dropout=0.1) applied to x of shape (16, 32).
  B, n_inputs, n_outputs, mlp_width, mlp_depth, mlp_dropout = 16, 32, 16, 32, 4, 0.1

  key = jax.random.PRNGKey(0)
  kx, kp = jax.random.split(key)
  x = jax.random.normal(kx, (B, n_inputs), dtype=jnp.float32)
  params = init_mlp_params(kp, n_inputs, n_outputs, mlp_width, mlp_depth)

  # train=True path (dropout active via precomputed, pre-scaled keep masks).
  y_train = mlp_forward(x, params, dropout_p=mlp_dropout, train=True, seed=1234)
  jax.block_until_ready(y_train)
  assert y_train.shape == (B, n_outputs)
  assert bool(jnp.all(jnp.isfinite(y_train)))

  # train=False path checked against pure-JAX reference.
  y_eval = mlp_forward(x, params, dropout_p=mlp_dropout, train=False)
  jax.block_until_ready(y_eval)
  y_ref = mlp_ref(x, params)
  assert y_eval.shape == (B, n_outputs)
  assert jnp.allclose(y_eval, y_ref, atol=1e-4, rtol=1e-4), "mismatch vs reference"

  # Ragged batch (not a multiple of the tile / of 8): exercised via padding.
  x_odd = x[:13]
  y_odd = mlp_forward(x_odd, params, dropout_p=mlp_dropout, train=False)
  jax.block_until_ready(y_odd)
  assert jnp.allclose(y_odd, y_ref[:13], atol=1e-4, rtol=1e-4), "ragged mismatch"

  print("KERNEL_OK")
</pallas_src>

<mosaic_0001>
module attributes {stable_mosaic.version = 11 : i64} {
  func.func @kernel(%arg0: i32, %arg1: memref<16x128xf32, #tpu.memory_space<vmem>>, %arg2: memref<128x128xf32, #tpu.memory_space<vmem>>, %arg3: memref<1x128xf32, #tpu.memory_space<vmem>>, %arg4: memref<2x128x128xf32, #tpu.memory_space<vmem>>, %arg5: memref<2x1x128xf32, #tpu.memory_space<vmem>>, %arg6: memref<128x128xf32, #tpu.memory_space<vmem>>, %arg7: memref<1x128xf32, #tpu.memory_space<vmem>>, %arg8: memref<3x16x128xf32, #tpu.memory_space<vmem>>, %arg9: memref<16x128xf32, #tpu.memory_space<vmem>>) attributes {dimension_semantics = [#tpu.dimension_semantics<parallel>], iteration_bounds = array<i64: 1>, scalar_prefetch = 0 : i64, scratch_operands = 0 : i64, tpu.core_type = #tpu.core_type<tc>, window_params = [{transform_indices = @transform_0, window_bounds = array<i64: 16, 128>}, {pipeline_mode = #tpu.pipeline_mode<synchronous>, transform_indices = @transform_1, window_bounds = array<i64: 128, 128>}, {pipeline_mode = #tpu.pipeline_mode<synchronous>, transform_indices = @transform_2, window_bounds = array<i64: 1, 128>}, {pipeline_mode = #tpu.pipeline_mode<synchronous>, transform_indices = @transform_3, window_bounds = array<i64: 2, 128, 128>}, {pipeline_mode = #tpu.pipeline_mode<synchronous>, transform_indices = @transform_4, window_bounds = array<i64: 2, 1, 128>}, {pipeline_mode = #tpu.pipeline_mode<synchronous>, transform_indices = @transform_5, window_bounds = array<i64: 128, 128>}, {pipeline_mode = #tpu.pipeline_mode<synchronous>, transform_indices = @transform_6, window_bounds = array<i64: 1, 128>}, {transform_indices = @transform_7, window_bounds = array<i64: 3, 16, 128>}, {transform_indices = @transform_8, window_bounds = array<i64: 16, 128>}]} {
    %c0 = arith.constant 0 : index
    %c0_0 = arith.constant 0 : index
    %0 = vector.load %arg1[%c0, %c0_0] : memref<16x128xf32, #tpu.memory_space<vmem>>, vector<16x128xf32>
    %c0_1 = arith.constant 0 : index
    %c0_2 = arith.constant 0 : index
    %1 = vector.load %arg2[%c0_1, %c0_2] : memref<128x128xf32, #tpu.memory_space<vmem>>, vector<128x128xf32>
    %cst = arith.constant dense<0.000000e+00> : vector<16x128xf32>
    %2 = tpu.matmul %0, %1, %cst {dimension_numbers = #tpu.dot_dimension_numbers<[1], [0], [0], [1], [0, 0, 1, 1], [], []>} : vector<16x128xf32>, vector<128x128xf32>, vector<16x128xf32> -> vector<16x128xf32>
    %c0_3 = arith.constant 0 : index
    %c0_4 = arith.constant 0 : index
    %3 = vector.load %arg3[%c0_3, %c0_4] : memref<1x128xf32, #tpu.memory_space<vmem>>, vector<1x128xf32>
    %4 = vector.broadcast %3 : vector<1x128xf32> to vector<16x128xf32>
    %5 = arith.addf %2, %4 : vector<16x128xf32>
    %c0_5 = arith.constant 0 : index
    %c0_6 = arith.constant 0 : index
    %c0_7 = arith.constant 0 : index
    %6 = vector.load %arg8[%c0_5, %c0_6, %c0_7] : memref<3x16x128xf32, #tpu.memory_space<vmem>>, vector<1x16x128xf32>
    %7 = vector.shape_cast %6 : vector<1x16x128xf32> to vector<16x128xf32>
    %8 = arith.mulf %5, %7 : vector<16x128xf32>
    %cst_8 = arith.constant 0.000000e+00 : f32
    %9 = vector.broadcast %cst_8 : f32 to vector<16x128xf32>
    %10 = arith.maximumf %8, %9 : vector<16x128xf32>
    %c0_9 = arith.constant 0 : index
    %c0_10 = arith.constant 0 : index
    %c0_11 = arith.constant 0 : index
    %11 = vector.load %arg4[%c0_9, %c0_10, %c0_11] : memref<2x128x128xf32, #tpu.memory_space<vmem>>, vector<1x128x128xf32>
    %12 = vector.shape_cast %11 : vector<1x128x128xf32> to vector<128x128xf32>
    %cst_12 = arith.constant dense<0.000000e+00> : vector<16x128xf32>
    %13 = tpu.matmul %10, %12, %cst_12 {dimension_numbers = #tpu.dot_dimension_numbers<[1], [0], [0], [1], [0, 0, 1, 1], [], []>} : vector<16x128xf32>, vector<128x128xf32>, vector<16x128xf32> -> vector<16x128xf32>
    %c0_13 = arith.constant 0 : index
    %c0_14 = arith.constant 0 : index
    %c0_15 = arith.constant 0 : index
    %14 = vector.load %arg5[%c0_13, %c0_14, %c0_15] : memref<2x1x128xf32, #tpu.memory_space<vmem>>, vector<1x1x128xf32>
    %15 = vector.shape_cast %14 : vector<1x1x128xf32> to vector<1x128xf32>
    %16 = vector.broadcast %15 : vector<1x128xf32> to vector<16x128xf32>
    %17 = arith.addf %13, %16 : vector<16x128xf32>
    %c1 = arith.constant 1 : index
    %c0_16 = arith.constant 0 : index
    %c0_17 = arith.constant 0 : index
    %18 = vector.load %arg8[%c1, %c0_16, %c0_17] : memref<3x16x128xf32, #tpu.memory_space<vmem>>, vector<1x16x128xf32>
    %19 = vector.shape_cast %18 : vector<1x16x128xf32> to vector<16x128xf32>
    %20 = arith.mulf %17, %19 : vector<16x128xf32>
    %cst_18 = arith.constant 0.000000e+00 : f32
    %21 = vector.broadcast %cst_18 : f32 to vector<16x128xf32>
    %22 = arith.maximumf %20, %21 : vector<16x128xf32>
    %c1_19 = arith.constant 1 : index
    %c0_20 = arith.constant 0 : index
    %c0_21 = arith.constant 0 : index
    %23 = vector.load %arg4[%c1_19, %c0_20, %c0_21] : memref<2x128x128xf32, #tpu.memory_space<vmem>>, vector<1x128x128xf32>
    %24 = vector.shape_cast %23 : vector<1x128x128xf32> to vector<128x128xf32>
    %cst_22 = arith.constant dense<0.000000e+00> : vector<16x128xf32>
    %25 = tpu.matmul %22, %24, %cst_22 {dimension_numbers = #tpu.dot_dimension_numbers<[1], [0], [0], [1], [0, 0, 1, 1], [], []>} : vector<16x128xf32>, vector<128x128xf32>, vector<16x128xf32> -> vector<16x128xf32>
    %c1_23 = arith.constant 1 : index
    %c0_24 = arith.constant 0 : index
    %c0_25 = arith.constant 0 : index
    %26 = vector.load %arg5[%c1_23, %c0_24, %c0_25] : memref<2x1x128xf32, #tpu.memory_space<vmem>>, vector<1x1x128xf32>
    %27 = vector.shape_cast %26 : vector<1x1x128xf32> to vector<1x128xf32>
    %28 = vector.broadcast %27 : vector<1x128xf32> to vector<16x128xf32>
    %29 = arith.addf %25, %28 : vector<16x128xf32>
    %c2 = arith.constant 2 : index
    %c0_26 = arith.constant 0 : index
    %c0_27 = arith.constant 0 : index
    %30 = vector.load %arg8[%c2, %c0_26, %c0_27] : memref<3x16x128xf32, #tpu.memory_space<vmem>>, vector<1x16x128xf32>
    %31 = vector.shape_cast %30 : vector<1x16x128xf32> to vector<16x128xf32>
    %32 = arith.mulf %29, %31 : vector<16x128xf32>
    %cst_28 = arith.constant 0.000000e+00 : f32
    %33 = vector.broadcast %cst_28 : f32 to vector<16x128xf32>
    %34 = arith.maximumf %32, %33 : vector<16x128xf32>
    %c0_29 = arith.constant 0 : index
    %c0_30 = arith.constant 0 : index
    %35 = vector.load %arg6[%c0_29, %c0_30] : memref<128x128xf32, #tpu.memory_space<vmem>>, vector<128x128xf32>
    %cst_31 = arith.constant dense<0.000000e+00> : vector<16x128xf32>
    %36 = tpu.matmul %34, %35, %cst_31 {dimension_numbers = #tpu.dot_dimension_numbers<[1], [0], [0], [1], [0, 0, 1, 1], [], []>} : vector<16x128xf32>, vector<128x128xf32>, vector<16x128xf32> -> vector<16x128xf32>
    %c0_32 = arith.constant 0 : index
    %c0_33 = arith.constant 0 : index
    %37 = vector.load %arg7[%c0_32, %c0_33] : memref<1x128xf32, #tpu.memory_space<vmem>>, vector<1x128xf32>
    %38 = vector.broadcast %37 : vector<1x128xf32> to vector<16x128xf32>
    %39 = arith.addf %36, %38 : vector<16x128xf32>
    %c0_34 = arith.constant 0 : index
    %c0_35 = arith.constant 0 : index
    %40 = vector.load %arg9[%c0_34, %c0_35] : memref<16x128xf32, #tpu.memory_space<vmem>>, vector<16x128xf32>
    tpu.vector_store %arg9[%c0_34, %c0_35], %39 {strides = array<i32>} : memref<16x128xf32, #tpu.memory_space<vmem>>, vector<16x128xf32>,
    return
  }
  func.func @transform_0(%arg0: i32) -> (i32, i32) {
    %c0_i32 = arith.constant 0 : i32
    %c0_i32_0 = arith.constant 0 : i32
    return %arg0, %c0_i32 : i32, i32
  }
  func.func @transform_1(%arg0: i32) -> (i32, i32) {
    %c0_i32 = arith.constant 0 : i32
    %c0_i32_0 = arith.constant 0 : i32
    %c0_i32_1 = arith.constant 0 : i32
    return %c0_i32, %c0_i32_0 : i32, i32
  }
  func.func @transform_2(%arg0: i32) -> (i32, i32) {
    %c0_i32 = arith.constant 0 : i32
    %c0_i32_0 = arith.constant 0 : i32
    %c0_i32_1 = arith.constant 0 : i32
    return %c0_i32, %c0_i32_0 : i32, i32
  }
  func.func @transform_3(%arg0: i32) -> (i32, i32, i32) {
    %c0_i32 = arith.constant 0 : i32
    %c0_i32_0 = arith.constant 0 : i32
    %c0_i32_1 = arith.constant 0 : i32
    %c0_i32_2 = arith.constant 0 : i32
    return %c0_i32, %c0_i32_0, %c0_i32_1 : i32, i32, i32
  }
  func.func @transform_4(%arg0: i32) -> (i32, i32, i32) {
    %c0_i32 = arith.constant 0 : i32
    %c0_i32_0 = arith.constant 0 : i32
    %c0_i32_1 = arith.constant 0 : i32
    %c0_i32_2 = arith.constant 0 : i32
    return %c0_i32, %c0_i32_0, %c0_i32_1 : i32, i32, i32
  }
  func.func @transform_5(%arg0: i32) -> (i32, i32) {
    %c0_i32 = arith.constant 0 : i32
    %c0_i32_0 = arith.constant 0 : i32
    %c0_i32_1 = arith.constant 0 : i32
    return %c0_i32, %c0_i32_0 : i32, i32
  }
  func.func @transform_6(%arg0: i32) -> (i32, i32) {
    %c0_i32 = arith.constant 0 : i32
    %c0_i32_0 = arith.constant 0 : i32
    %c0_i32_1 = arith.constant 0 : i32
    return %c0_i32, %c0_i32_0 : i32, i32
  }
  func.func @transform_7(%arg0: i32) -> (i32, i32, i32) {
    %c0_i32 = arith.constant 0 : i32
    %c0_i32_0 = arith.constant 0 : i32
    %c0_i32_1 = arith.constant 0 : i32
    return %c0_i32, %arg0, %c0_i32_0 : i32, i32, i32
  }
  func.func @transform_8(%arg0: i32) -> (i32, i32) {
    %c0_i32 = arith.constant 0 : i32
    %c0_i32_0 = arith.constant 0 : i32
    return %arg0, %c0_i32 : i32, i32
  }
}

</mosaic_0001>

<llo_original>
// kernel: tpu_custom_call.1
$region0: #{tpu_custom_call.1}
  #allocation0 [shape = 'u32[]', space=smem, size = 0x4, offset = 0x4, fixed_abs, tag = 'smem constant byte address 0x4 - core index']
  #allocation1 [shape = 'u32[144,128]{1,0:T(1,128)}', space=vmem, size = 0x12000, scoped, tag = 'internal scratch']
  %s0 = inlined_call_operand.hbm [shape: f32[16,128], index: 0, kind: input, shape index: {}]
  %s1 = inlined_call_operand.hbm [shape: f32[128,128], index: 1, kind: input, shape index: {}]
  %s2 = inlined_call_operand.vmem [shape: f32[1,128], index: 2, kind: input, shape index: {}]
  %s3 = inlined_call_operand.hbm [shape: f32[2,128,128], index: 3, kind: input, shape index: {}]
  %s4 = inlined_call_operand.vmem [shape: f32[2,1,128], index: 4, kind: input, shape index: {}]
  %s5 = inlined_call_operand.hbm [shape: f32[128,128], index: 5, kind: input, shape index: {}]
  %s6 = inlined_call_operand.vmem [shape: f32[1,128], index: 6, kind: input, shape index: {}]
  %s7 = inlined_call_operand.hbm [shape: f32[3,16,128], index: 7, kind: input, shape index: {}]
  %s8 = inlined_call_operand.hbm [shape: f32[16,128], index: 8, kind: output, shape index: {}]
  %s9 = sld [smem:[#allocation0]]
  $region62: #{tpu_custom_call.1} parent=0
    _
  %s11 = ssub.s32 1, %s9
  %s12 = scalar_select 0, %s11, %s9
  $region1: #{tpu_custom_call.1} parent=0
    #allocation2 [shape = 'u8[8192]{0}', space=vmem, size = 0x2000, scoped, tag = 'input window, operand 0, single buffered']
    #allocation3 [shape = 's32[1]{0}', space=sflag, size = 0x4, scoped, tag = 'scoped memory for tpu_custom_call.1']
    #allocation4 [shape = 's32[1]{0}', space=sflag, size = 0x4, scoped, tag = 'scoped memory for tpu_custom_call.1']
    #allocation5 [shape = 'u8[65536]{0}', space=vmem, size = 0x10000, scoped, tag = 'input window, operand 1, single buffered']
    #allocation6 [shape = 's32[1]{0}', space=sflag, size = 0x4, scoped, tag = 'scoped memory for tpu_custom_call.1']
    #allocation7 [shape = 'u8[131072]{0}', space=vmem, size = 0x20000, scoped, tag = 'input window, operand 3, single buffered']
    #allocation8 [shape = 'u8[65536]{0}', space=vmem, size = 0x10000, scoped, tag = 'input window, operand 5, single buffered']
    #allocation9 [shape = 's32[1]{0}', space=sflag, size = 0x4, scoped, tag = 'scoped memory for tpu_custom_call.1']
    #allocation10 [shape = 'u8[24576]{0}', space=vmem, size = 0x6000, scoped, tag = 'input window, operand 7, single buffered']
    #allocation11 [shape = 'u8[8192]{0}', space=vmem, size = 0x2000, scoped, tag = 'output window, operand 0, single buffered']
    %13 = vsyncpa [#allocation3], 0
    %14 = vsyncpa [#allocation6], 0
    %15 = vsyncpa [#allocation9], 0
    %16 = vsyncpa [#allocation4], 0
    // Predicated region
    $region2: #{tpu_custom_call.1} parent=1 // pred_check
      _
    $region3: #{tpu_custom_call.1} parent=1 // pred_check_branch
      %18 = sbr.rel (0) target = $region5
    $region4: #{tpu_custom_call.1} parent=1 // pred_region
      %s20 = ssub.s32 256, 256
      %21 = vsyncadd [#allocation3], %s20
      %s22 = sshll.u32 [#allocation2], 4
      %s23 = int_to_ptr.vmem [resolvable:$true] %s22
      %28 = dma.hbm_to_vmem [thread:$0]  %s0, 256, %s23, [#allocation3], 128, 128, 8
    $region5: #{tpu_custom_call.1} parent=1 // pred_fallthru
      _
    // Predicated region
    $region6: #{tpu_custom_call.1} parent=1 // pred_check
      _
    $region7: #{tpu_custom_call.1} parent=1 // pred_check_branch
      %30 = sbr.rel (0) target = $region9
    $region8: #{tpu_custom_call.1} parent=1 // pred_region
      %s32 = ssub.s32 2048, 2048
      %33 = vsyncadd [#allocation6], %s32
      %s34 = sshll.u32 [#allocation5], 4
      %s35 = int_to_ptr.vmem [resolvable:$true] %s34
      %40 = dma.hbm_to_vmem [thread:$0]  %s1, 2048, %s35, [#allocation6], 128, 128, 8
    $region9: #{tpu_custom_call.1} parent=1 // pred_fallthru
      _
    // Predicated region
    $region10: #{tpu_custom_call.1} parent=1 // pred_check
      _
    $region11: #{tpu_custom_call.1} parent=1 // pred_check_branch
      %42 = sbr.rel (0) target = $region13
    $region12: #{tpu_custom_call.1} parent=1 // pred_region
      _
    $region13: #{tpu_custom_call.1} parent=1 // pred_fallthru
      _
    // Predicated region
    $region14: #{tpu_custom_call.1} parent=1 // pred_check
      _
    $region15: #{tpu_custom_call.1} parent=1 // pred_check_branch
      %44 = sbr.rel (0) target = $region17
    $region16: #{tpu_custom_call.1} parent=1 // pred_region
      %s46 = ssub.s32 4096, 4096
      %47 = vsyncadd [#allocation6], %s46
      %s48 = sshll.u32 [#allocation7], 4
      %s49 = int_to_ptr.vmem [resolvable:$true] %s48
      %54 = dma.hbm_to_vmem [thread:$0]  %s3, 4096, %s49, [#allocation6], 128, 128, 8
    $region17: #{tpu_custom_call.1} parent=1 // pred_fallthru
      _
    // Predicated region
    $region18: #{tpu_custom_call.1} parent=1 // pred_check
      _
    $region19: #{tpu_custom_call.1} parent=1 // pred_check_branch
      %56 = sbr.rel (0) target = $region21
    $region20: #{tpu_custom_call.1} parent=1 // pred_region
      _
    $region21: #{tpu_custom_call.1} parent=1 // pred_fallthru
      _
    // Predicated region
    $region22: #{tpu_custom_call.1} parent=1 // pred_check
      _
    $region23: #{tpu_custom_call.1} parent=1 // pred_check_branch
      %58 = sbr.rel (0) target = $region25
    $region24: #{tpu_custom_call.1} parent=1 // pred_region
      %s60 = ssub.s32 2048, 2048
      %61 = vsyncadd [#allocation9], %s60
      %s62 = sshll.u32 [#allocation8], 4
      %s63 = int_to_ptr.vmem [resolvable:$true] %s62
      %68 = dma.hbm_to_vmem [thread:$0]  %s5, 2048, %s63, [#allocation9], 128, 128, 8
    $region25: #{tpu_custom_call.1} parent=1 // pred_fallthru
      _
    // Predicated region
    $region26: #{tpu_custom_call.1} parent=1 // pred_check
      _
    $region27: #{tpu_custom_call.1} parent=1 // pred_check_branch
      %70 = sbr.rel (0) target = $region29
    $region28: #{tpu_custom_call.1} parent=1 // pred_region
      _
    $region29: #{tpu_custom_call.1} parent=1 // pred_fallthru
      _
    // Predicated region
    $region30: #{tpu_custom_call.1} parent=1 // pred_check
      _
    $region31: #{tpu_custom_call.1} parent=1 // pred_check_branch
      %72 = sbr.rel (0) target = $region33
    $region32: #{tpu_custom_call.1} parent=1 // pred_region
      %s74 = ssub.s32 768, 768
      %75 = vsyncadd [#allocation9], %s74
      %s76 = sshll.u32 [#allocation10], 4
      %s77 = int_to_ptr.vmem [resolvable:$true] %s76
      %82 = dma.hbm_to_vmem [thread:$0]  %s7, 768, %s77, [#allocation9], 128, 128, 8
    $region33: #{tpu_custom_call.1} parent=1 // pred_fallthru
      _
    // Predicated region
    $region34: #{tpu_custom_call.1} parent=1 // pred_check
      _
    $region35: #{tpu_custom_call.1} parent=1 // pred_check_branch
      %84 = sbr.rel (0) target = $region37
    $region36: #{tpu_custom_call.1} parent=1 // pred_region
      %85 = dma.done [#allocation3], 256
    $region37: #{tpu_custom_call.1} parent=1 // pred_fallthru
      _
    // Predicated region
    $region38: #{tpu_custom_call.1} parent=1 // pred_check
      _
    $region39: #{tpu_custom_call.1} parent=1 // pred_check_branch
      %87 = sbr.rel (0) target = $region41
    $region40: #{tpu_custom_call.1} parent=1 // pred_region
      %88 = dma.done [#allocation6], 2048
    $region41: #{tpu_custom_call.1} parent=1 // pred_fallthru
      _
    // Predicated region
    $region42: #{tpu_custom_call.1} parent=1 // pred_check
      _
    $region43: #{tpu_custom_call.1} parent=1 // pred_check_branch
      %90 = sbr.rel (0) target = $region45
    $region44: #{tpu_custom_call.1} parent=1 // pred_region
      %91 = dma.done [#allocation6], 4096
    $region45: #{tpu_custom_call.1} parent=1 // pred_fallthru
      _
    // Predicated region
    $region46: #{tpu_custom_call.1} parent=1 // pred_check
      _
    $region47: #{tpu_custom_call.1} parent=1 // pred_check_branch
      %93 = sbr.rel (0) target = $region49
    $region48: #{tpu_custom_call.1} parent=1 // pred_region
      %94 = dma.done [#allocation9], 2048
    $region49: #{tpu_custom_call.1} parent=1 // pred_fallthru
      _
    // Predicated region
    $region50: #{tpu_custom_call.1} parent=1 // pred_check
      _
    $region51: #{tpu_custom_call.1} parent=1 // pred_check_branch
      %96 = sbr.rel (0) target = $region53
    $region52: #{tpu_custom_call.1} parent=1 // pred_region
      %97 = dma.done [#allocation9], 768
    $region53: #{tpu_custom_call.1} parent=1 // pred_fallthru
      _
    %v98 = vld [vmem:[#allocation2] sm:$0xff]
    %v99 = vld [vmem:[#allocation2 + $0x8] sm:$0xff]
    %v100 = vld [vmem:[#allocation5] sm:$0xff]
    %v101 = vld [vmem:[#allocation5 + $0x8] sm:$0xff]
    %v102 = vld [vmem:[#allocation5 + $0x10] sm:$0xff]
    %v103 = vld [vmem:[#allocation5 + $0x18] sm:$0xff]
    %v104 = vld [vmem:[#allocation5 + $0x20] sm:$0xff]
    %v105 = vld [vmem:[#allocation5 + $0x28] sm:$0xff]
    %v106 = vld [vmem:[#allocation5 + $0x30] sm:$0xff]
    %v107 = vld [vmem:[#allocation5 + $0x38] sm:$0xff]
    %v108 = vld [vmem:[#allocation5 + $0x40] sm:$0xff]
    %v109 = vld [vmem:[#allocation5 + $0x48] sm:$0xff]
    %v110 = vld [vmem:[#allocation5 + $0x50] sm:$0xff]
    %v111 = vld [vmem:[#allocation5 + $0x58] sm:$0xff]
    %v112 = vld [vmem:[#allocation5 + $0x60] sm:$0xff]
    %v113 = vld [vmem:[#allocation5 + $0x68] sm:$0xff]
    %v114 = vld [vmem:[#allocation5 + $0x70] sm:$0xff]
    %v115 = vld [vmem:[#allocation5 + $0x78] sm:$0xff]
    %v116 = vld [vmem:[%s2] sm:$0x1]
    %v118 = vlaneseq
    %v119 = vshrl.u32 %v118, 7
    %v120 = vsub.s32 0, %v119
    %v121 = vrot.slane %v116, %v120
    %123 = vmatprep.subr.mxu0 0.0
    %124 = vmatpush1.msra.mxu0 %v100
    %125 = vmatprep.subr.mxu0 0.0
    %126 = vmatpush1.msra.mxu0 %v101
    %127 = vmatprep.subr.mxu0 0.0
    %128 = vmatpush1.msra.mxu0 %v102
    %129 = vmatprep.subr.mxu0 0.0
    %130 = vmatpush1.msra.mxu0 %v103
    %131 = vmatprep.subr.mxu0 0.0
    %132 = vmatpush1.msra.mxu0 %v104
    %133 = vmatprep.subr.mxu0 0.0
    %134 = vmatpush1.msra.mxu0 %v105
    %135 = vmatprep.subr.mxu0 0.0
    %136 = vmatpush1.msra.mxu0 %v106
    %137 = vmatprep.subr.mxu0 0.0
    %138 = vmatpush1.msra.mxu0 %v107
    %139 = vmatprep.subr.mxu0 0.0
    %140 = vmatpush1.msra.mxu0 %v108
    %141 = vmatprep.subr.mxu0 0.0
    %142 = vmatpush1.msra.mxu0 %v109
    %143 = vmatprep.subr.mxu0 0.0
    %144 = vmatpush1.msra.mxu0 %v110
    %145 = vmatprep.subr.mxu0 0.0
    %146 = vmatpush1.msra.mxu0 %v111
    %147 = vmatprep.subr.mxu0 0.0
    %148 = vmatpush1.msra.mxu0 %v112
    %149 = vmatprep.subr.mxu0 0.0
    %150 = vmatpush1.msra.mxu0 %v113
    %151 = vmatprep.subr.mxu0 0.0
    %152 = vmatpush1.msra.mxu0 %v114
    %153 = vmatprep.subr.mxu0 0.0
    %154 = vmatpush1.msra.mxu0 %v115
    %155 = vmatprep.subr.mxu0 0.0
    %156 = vmatpush1.msra.mxu0 0.0
    %157 = vmatprep.subr.mxu0 0.0
    %158 = vmatpush1.msra.mxu0 0.0
    %159 = vmatprep.subr.mxu0 0.0
    %160 = vmatpush1.msra.mxu0 0.0
    %161 = vmatprep.subr.mxu0 0.0
    %162 = vmatpush1.msra.mxu0 0.0
    %163 = vmatprep.subr.mxu0 0.0
    %164 = vmatpush1.msra.mxu0 0.0
    %165 = vmatprep.subr.mxu0 0.0
    %166 = vmatpush1.msra.mxu0 0.0
    %167 = vmatprep.subr.mxu0 0.0
    %168 = vmatpush1.msra.mxu0 0.0
    %169 = vmatprep.subr.mxu0 0.0
    %170 = vmatpush1.msra.mxu0 0.0
    %171 = vmatprep.subr.mxu0 0.0
    %172 = vmatpush1.msra.mxu0 0.0
    %173 = vmatprep.subr.mxu0 0.0
    %174 = vmatpush1.msra.mxu0 0.0
    %175 = vmatprep.subr.mxu0 0.0
    %176 = vmatpush1.msra.mxu0 0.0
    %177 = vmatprep.subr.mxu0 0.0
    %178 = vmatpush1.msra.mxu0 0.0
    %179 = vmatprep.subr.mxu0 0.0
    %180 = vmatpush1.msra.mxu0 0.0
    %181 = vmatprep.subr.mxu0 0.0
    %182 = vmatpush1.msra.mxu0 0.0
    %183 = vmatprep.subr.mxu0 0.0
    %184 = vmatpush1.msra.mxu0 0.0
    %185 = vmatprep.subr.mxu0 0.0
    %186 = vmatpush1.msra.mxu0 0.0
    %187 = vmatprep.mubr.f32.mxu0 0.0
    %188 = vmatmul.mubr.f32.gmra.mrb[0].mxu0 %v98
    %v189 = vpop.f32.mrb[0].mxu0
    %v190 = vadd.f32 %v121, %v189
    %v191 = vpop.f32.mrb[0].mxu0
    %192 = vmatprep.mubr.f32.mxu0 0.0
    %193 = vmatmul.mubr.f32.gmra.mrb[0].mxu0 %v99
    %v194 = vpop.f32.mrb[0].mxu0
    %v195 = vadd.f32 %v121, %v194
    %v196 = vpop.f32.mrb[0].mxu0
    %197 = vdwg.mxu0
    %v198 = vld [vmem:[#allocation10] sm:$0xff]
    %v199 = vld [vmem:[#allocation10 + $0x8] sm:$0xff]
    %v200 = vmul.f32 %v190, %v198
    %v201 = vmul.f32 %v195, %v199
    %v202 = vmax.f32 %v200, 0.0
    %v203 = vmax.f32 %v201, 0.0
    %v204 = vld [vmem:[#allocation7] sm:$0xff]
    %v205 = vld [vmem:[#allocation7 + $0x8] sm:$0xff]
    %v206 = vld [vmem:[#allocation7 + $0x10] sm:$0xff]
    %v207 = vld [vmem:[#allocation7 + $0x18] sm:$0xff]
    %v208 = vld [vmem:[#allocation7 + $0x20] sm:$0xff]
    %v209 = vld [vmem:[#allocation7 + $0x28] sm:$0xff]
    %v210 = vld [vmem:[#allocation7 + $0x30] sm:$0xff]
    %v211 = vld [vmem:[#allocation7 + $0x38] sm:$0xff]
    %v212 = vld [vmem:[#allocation7 + $0x40] sm:$0xff]
    %v213 = vld [vmem:[#allocation7 + $0x48] sm:$0xff]
    %v214 = vld [vmem:[#allocation7 + $0x50] sm:$0xff]
    %v215 = vld [vmem:[#allocation7 + $0x58] sm:$0xff]
    %v216 = vld [vmem:[#allocation7 + $0x60] sm:$0xff]
    %v217 = vld [vmem:[#allocation7 + $0x68] sm:$0xff]
    %v218 = vld [vmem:[#allocation7 + $0x70] sm:$0xff]
    %v219 = vld [vmem:[#allocation7 + $0x78] sm:$0xff]
    %v220 = vld [vmem:[%s4] sm:$0x1]
    %v222 = vlaneseq
    %v223 = vshrl.u32 %v222, 7
    %v224 = vsub.s32 0, %v223
    %v225 = vrot.slane %v220, %v224
    %227 = vmatprep.subr.mxu0 0.0
    %228 = vmatpush1.msra.mxu0 %v204
    %229 = vmatprep.subr.mxu0 0.0
    %230 = vmatpush1.msra.mxu0 %v205
    %231 = vmatprep.subr.mxu0 0.0
    %232 = vmatpush1.msra.mxu0 %v206
    %233 = vmatprep.subr.mxu0 0.0
    %234 = vmatpush1.msra.mxu0 %v207
    %235 = vmatprep.subr.mxu0 0.0
    %236 = vmatpush1.msra.mxu0 %v208
    %237 = vmatprep.subr.mxu0 0.0
    %238 = vmatpush1.msra.mxu0 %v209
    %239 = vmatprep.subr.mxu0 0.0
    %240 = vmatpush1.msra.mxu0 %v210
    %241 = vmatprep.subr.mxu0 0.0
    %242 = vmatpush1.msra.mxu0 %v211
    %243 = vmatprep.subr.mxu0 0.0
    %244 = vmatpush1.msra.mxu0 %v212
    %245 = vmatprep.subr.mxu0 0.0
    %246 = vmatpush1.msra.mxu0 %v213
    %247 = vmatprep.subr.mxu0 0.0
    %248 = vmatpush1.msra.mxu0 %v214
    %249 = vmatprep.subr.mxu0 0.0
    %250 = vmatpush1.msra.mxu0 %v215
    %251 = vmatprep.subr.mxu0 0.0
    %252 = vmatpush1.msra.mxu0 %v216
    %253 = vmatprep.subr.mxu0 0.0
    %254 = vmatpush1.msra.mxu0 %v217
    %255 = vmatprep.subr.mxu0 0.0
    %256 = vmatpush1.msra.mxu0 %v218
    %257 = vmatprep.subr.mxu0 0.0
    %258 = vmatpush1.msra.mxu0 %v219
    %259 = vmatprep.subr.mxu0 0.0
    %260 = vmatpush1.msra.mxu0 0.0
    %261 = vmatprep.subr.mxu0 0.0
    %262 = vmatpush1.msra.mxu0 0.0
    %263 = vmatprep.subr.mxu0 0.0
    %264 = vmatpush1.msra.mxu0 0.0
    %265 = vmatprep.subr.mxu0 0.0
    %266 = vmatpush1.msra.mxu0 0.0
    %267 = vmatprep.subr.mxu0 0.0
    %268 = vmatpush1.msra.mxu0 0.0
    %269 = vmatprep.subr.mxu0 0.0
    %270 = vmatpush1.msra.mxu0 0.0
    %271 = vmatprep.subr.mxu0 0.0
    %272 = vmatpush1.msra.mxu0 0.0
    %273 = vmatprep.subr.mxu0 0.0
    %274 = vmatpush1.msra.mxu0 0.0
    %275 = vmatprep.subr.mxu0 0.0
    %276 = vmatpush1.msra.mxu0 0.0
    %277 = vmatprep.subr.mxu0 0.0
    %278 = vmatpush1.msra.mxu0 0.0
    %279 = vmatprep.subr.mxu0 0.0
    %280 = vmatpush1.msra.mxu0 0.0
    %281 = vmatprep.subr.mxu0 0.0
    %282 = vmatpush1.msra.mxu0 0.0
    %283 = vmatprep.subr.mxu0 0.0
    %284 = vmatpush1.msra.mxu0 0.0
    %285 = vmatprep.subr.mxu0 0.0
    %286 = vmatpush1.msra.mxu0 0.0
    %287 = vmatprep.subr.mxu0 0.0
    %288 = vmatpush1.msra.mxu0 0.0
    %289 = vmatprep.subr.mxu0 0.0
    %290 = vmatpush1.msra.mxu0 0.0
    %291 = vmatprep.mubr.f32.mxu0 0.0
    %292 = vmatmul.mubr.f32.gmra.mrb[0].mxu0 %v202
    %v293 = vpop.f32.mrb[0].mxu0
    %v294 = vadd.f32 %v225, %v293
    %v295 = vpop.f32.mrb[0].mxu0
    %296 = vmatprep.mubr.f32.mxu0 0.0
    %297 = vmatmul.mubr.f32.gmra.mrb[0].mxu0 %v203
    %v298 = vpop.f32.mrb[0].mxu0
    %v299 = vadd.f32 %v225, %v298
    %v300 = vpop.f32.mrb[0].mxu0
    %301 = vdwg.mxu0
    %s302 = scalar_lea.vmem [#allocation10], 16
    %v303 = vld [vmem:[%s302] sm:$0xff]
    %v304 = vld [vmem:[%s302 + $0x8] sm:$0xff]
    %v305 = vmul.f32 %v294, %v303
    %v306 = vmul.f32 %v299, %v304
    %v307 = vmax.f32 %v305, 0.0
    %v308 = vmax.f32 %v306, 0.0
    %s309 = scalar_lea.vmem [#allocation7], 128
    %v310 = vld [vmem:[%s309] sm:$0xff]
    %v311 = vld [vmem:[%s309 + $0x8] sm:$0xff]
    %v312 = vld [vmem:[%s309 + $0x10] sm:$0xff]
    %v313 = vld [vmem:[%s309 + $0x18] sm:$0xff]
    %v314 = vld [vmem:[%s309 + $0x20] sm:$0xff]
    %v315 = vld [vmem:[%s309 + $0x28] sm:$0xff]
    %v316 = vld [vmem:[%s309 + $0x30] sm:$0xff]
    %v317 = vld [vmem:[%s309 + $0x38] sm:$0xff]
    %v318 = vld [vmem:[%s309 + $0x40] sm:$0xff]
    %v319 = vld [vmem:[%s309 + $0x48] sm:$0xff]
    %v320 = vld [vmem:[%s309 + $0x50] sm:$0xff]
    %v321 = vld [vmem:[%s309 + $0x58] sm:$0xff]
    %v322 = vld [vmem:[%s309 + $0x60] sm:$0xff]
    %v323 = vld [vmem:[%s309 + $0x68] sm:$0xff]
    %v324 = vld [vmem:[%s309 + $0x70] sm:$0xff]
    %v325 = vld [vmem:[%s309 + $0x78] sm:$0xff]
    %s326 = scalar_lea.vmem %s4, 1
    %v327 = vld [vmem:[%s326] sm:$0x1]
    %v329 = vlaneseq
    %v330 = vshrl.u32 %v329, 7
    %v331 = vsub.s32 0, %v330
    %v332 = vrot.slane %v327, %v331
    %334 = vmatprep.subr.mxu0 0.0
    %335 = vmatpush1.msra.mxu0 %v310
    %336 = vmatprep.subr.mxu0 0.0
    %337 = vmatpush1.msra.mxu0 %v311
    %338 = vmatprep.subr.mxu0 0.0
    %339 = vmatpush1.msra.mxu0 %v312
    %340 = vmatprep.subr.mxu0 0.0
    %341 = vmatpush1.msra.mxu0 %v313
    %342 = vmatprep.subr.mxu0 0.0
    %343 = vmatpush1.msra.mxu0 %v314
    %344 = vmatprep.subr.mxu0 0.0
    %345 = vmatpush1.msra.mxu0 %v315
    %346 = vmatprep.subr.mxu0 0.0
    %347 = vmatpush1.msra.mxu0 %v316
    %348 = vmatprep.subr.mxu0 0.0
    %349 = vmatpush1.msra.mxu0 %v317
    %350 = vmatprep.subr.mxu0 0.0
    %351 = vmatpush1.msra.mxu0 %v318
    %352 = vmatprep.subr.mxu0 0.0
    %353 = vmatpush1.msra.mxu0 %v319
    %354 = vmatprep.subr.mxu0 0.0
    %355 = vmatpush1.msra.mxu0 %v320
    %356 = vmatprep.subr.mxu0 0.0
    %357 = vmatpush1.msra.mxu0 %v321
    %358 = vmatprep.subr.mxu0 0.0
    %359 = vmatpush1.msra.mxu0 %v322
    %360 = vmatprep.subr.mxu0 0.0
    %361 = vmatpush1.msra.mxu0 %v323
    %362 = vmatprep.subr.mxu0 0.0
    %363 = vmatpush1.msra.mxu0 %v324
    %364 = vmatprep.subr.mxu0 0.0
    %365 = vmatpush1.msra.mxu0 %v325
    %366 = vmatprep.subr.mxu0 0.0
    %367 = vmatpush1.msra.mxu0 0.0
    %368 = vmatprep.subr.mxu0 0.0
    %369 = vmatpush1.msra.mxu0 0.0
    %370 = vmatprep.subr.mxu0 0.0
    %371 = vmatpush1.msra.mxu0 0.0
    %372 = vmatprep.subr.mxu0 0.0
    %373 = vmatpush1.msra.mxu0 0.0
    %374 = vmatprep.subr.mxu0 0.0
    %375 = vmatpush1.msra.mxu0 0.0
    %376 = vmatprep.subr.mxu0 0.0
    %377 = vmatpush1.msra.mxu0 0.0
    %378 = vmatprep.subr.mxu0 0.0
    %379 = vmatpush1.msra.mxu0 0.0
    %380 = vmatprep.subr.mxu0 0.0
    %381 = vmatpush1.msra.mxu0 0.0
    %382 = vmatprep.subr.mxu0 0.0
    %383 = vmatpush1.msra.mxu0 0.0
    %384 = vmatprep.subr.mxu0 0.0
    %385 = vmatpush1.msra.mxu0 0.0
    %386 = vmatprep.subr.mxu0 0.0
    %387 = vmatpush1.msra.mxu0 0.0
    %388 = vmatprep.subr.mxu0 0.0
    %389 = vmatpush1.msra.mxu0 0.0
    %390 = vmatprep.subr.mxu0 0.0
    %391 = vmatpush1.msra.mxu0 0.0
    %392 = vmatprep.subr.mxu0 0.0
    %393 = vmatpush1.msra.mxu0 0.0
    %394 = vmatprep.subr.mxu0 0.0
    %395 = vmatpush1.msra.mxu0 0.0
    %396 = vmatprep.subr.mxu0 0.0
    %397 = vmatpush1.msra.mxu0 0.0
    %398 = vmatprep.mubr.f32.mxu0 0.0
    %399 = vmatmul.mubr.f32.gmra.mrb[0].mxu0 %v307
    %v400 = vpop.f32.mrb[0].mxu0
    %v401 = vadd.f32 %v332, %v400
    %v402 = vpop.f32.mrb[0].mxu0
    %403 = vmatprep.mubr.f32.mxu0 0.0
    %404 = vmatmul.mubr.f32.gmra.mrb[0].mxu0 %v308
    %v405 = vpop.f32.mrb[0].mxu0
    %v406 = vadd.f32 %v332, %v405
    %v407 = vpop.f32.mrb[0].mxu0
    %408 = vdwg.mxu0
    %s409 = scalar_lea.vmem [#allocation10], 32
    %v410 = vld [vmem:[%s409] sm:$0xff]
    %v411 = vld [vmem:[%s409 + $0x8] sm:$0xff]
    %v412 = vmul.f32 %v401, %v410
    %v413 = vmul.f32 %v406, %v411
    %v414 = vmax.f32 %v412, 0.0
    %v415 = vmax.f32 %v413, 0.0
    %v416 = vld [vmem:[#allocation8] sm:$0xff]
    %v417 = vld [vmem:[#allocation8 + $0x8] sm:$0xff]
    %v418 = vld [vmem:[#allocation8 + $0x10] sm:$0xff]
    %v419 = vld [vmem:[#allocation8 + $0x18] sm:$0xff]
    %v420 = vld [vmem:[#allocation8 + $0x20] sm:$0xff]
    %v421 = vld [vmem:[#allocation8 + $0x28] sm:$0xff]
    %v422 = vld [vmem:[#allocation8 + $0x30] sm:$0xff]
    %v423 = vld [vmem:[#allocation8 + $0x38] sm:$0xff]
    %v424 = vld [vmem:[#allocation8 + $0x40] sm:$0xff]
    %v425 = vld [vmem:[#allocation8 + $0x48] sm:$0xff]
    %v426 = vld [vmem:[#allocation8 + $0x50] sm:$0xff]
    %v427 = vld [vmem:[#allocation8 + $0x58] sm:$0xff]
    %v428 = vld [vmem:[#allocation8 + $0x60] sm:$0xff]
    %v429 = vld [vmem:[#allocation8 + $0x68] sm:$0xff]
    %v430 = vld [vmem:[#allocation8 + $0x70] sm:$0xff]
    %v431 = vld [vmem:[#allocation8 + $0x78] sm:$0xff]
    %v432 = vld [vmem:[%s6] sm:$0x1]
    %v434 = vlaneseq
    %v435 = vshrl.u32 %v434, 7
    %v436 = vsub.s32 0, %v435
    %v437 = vrot.slane %v432, %v436
    %439 = vmatprep.subr.mxu0 0.0
    %440 = vmatpush1.msra.mxu0 %v416
    %441 = vmatprep.subr.mxu0 0.0
    %442 = vmatpush1.msra.mxu0 %v417
    %443 = vmatprep.subr.mxu0 0.0
    %444 = vmatpush1.msra.mxu0 %v418
    %445 = vmatprep.subr.mxu0 0.0
    %446 = vmatpush1.msra.mxu0 %v419
    %447 = vmatprep.subr.mxu0 0.0
    %448 = vmatpush1.msra.mxu0 %v420
    %449 = vmatprep.subr.mxu0 0.0
    %450 = vmatpush1.msra.mxu0 %v421
    %451 = vmatprep.subr.mxu0 0.0
    %452 = vmatpush1.msra.mxu0 %v422
    %453 = vmatprep.subr.mxu0 0.0
    %454 = vmatpush1.msra.mxu0 %v423
    %455 = vmatprep.subr.mxu0 0.0
    %456 = vmatpush1.msra.mxu0 %v424
    %457 = vmatprep.subr.mxu0 0.0
    %458 = vmatpush1.msra.mxu0 %v425
    %459 = vmatprep.subr.mxu0 0.0
    %460 = vmatpush1.msra.mxu0 %v426
    %461 = vmatprep.subr.mxu0 0.0
    %462 = vmatpush1.msra.mxu0 %v427
    %463 = vmatprep.subr.mxu0 0.0
    %464 = vmatpush1.msra.mxu0 %v428
    %465 = vmatprep.subr.mxu0 0.0
    %466 = vmatpush1.msra.mxu0 %v429
    %467 = vmatprep.subr.mxu0 0.0
    %468 = vmatpush1.msra.mxu0 %v430
    %469 = vmatprep.subr.mxu0 0.0
    %470 = vmatpush1.msra.mxu0 %v431
    %471 = vmatprep.subr.mxu0 0.0
    %472 = vmatpush1.msra.mxu0 0.0
    %473 = vmatprep.subr.mxu0 0.0
    %474 = vmatpush1.msra.mxu0 0.0
    %475 = vmatprep.subr.mxu0 0.0
    %476 = vmatpush1.msra.mxu0 0.0
    %477 = vmatprep.subr.mxu0 0.0
    %478 = vmatpush1.msra.mxu0 0.0
    %479 = vmatprep.subr.mxu0 0.0
    %480 = vmatpush1.msra.mxu0 0.0
    %481 = vmatprep.subr.mxu0 0.0
    %482 = vmatpush1.msra.mxu0 0.0
    %483 = vmatprep.subr.mxu0 0.0
    %484 = vmatpush1.msra.mxu0 0.0
    %485 = vmatprep.subr.mxu0 0.0
    %486 = vmatpush1.msra.mxu0 0.0
    %487 = vmatprep.subr.mxu0 0.0
    %488 = vmatpush1.msra.mxu0 0.0
    %489 = vmatprep.subr.mxu0 0.0
    %490 = vmatpush1.msra.mxu0 0.0
    %491 = vmatprep.subr.mxu0 0.0
    %492 = vmatpush1.msra.mxu0 0.0
    %493 = vmatprep.subr.mxu0 0.0
    %494 = vmatpush1.msra.mxu0 0.0
    %495 = vmatprep.subr.mxu0 0.0
    %496 = vmatpush1.msra.mxu0 0.0
    %497 = vmatprep.subr.mxu0 0.0
    %498 = vmatpush1.msra.mxu0 0.0
    %499 = vmatprep.subr.mxu0 0.0
    %500 = vmatpush1.msra.mxu0 0.0
    %501 = vmatprep.subr.mxu0 0.0
    %502 = vmatpush1.msra.mxu0 0.0
    %503 = vmatprep.mubr.f32.mxu0 0.0
    %504 = vmatmul.mubr.f32.gmra.mrb[0].mxu0 %v414
    %v505 = vpop.f32.mrb[0].mxu0
    %v506 = vadd.f32 %v437, %v505
    %v507 = vpop.f32.mrb[0].mxu0
    %508 = vmatprep.mubr.f32.mxu0 0.0
    %509 = vmatmul.mubr.f32.gmra.mrb[0].mxu0 %v415
    %v510 = vpop.f32.mrb[0].mxu0
    %v511 = vadd.f32 %v437, %v510
    %v512 = vpop.f32.mrb[0].mxu0
    %513 = vdwg.mxu0
    %514 = vst [vmem:[#allocation11] sm:$0xff] %v506
    %515 = vst [vmem:[#allocation11 + $0x8] sm:$0xff] %v511
    // Predicated region
    $region54: #{tpu_custom_call.1} parent=1 // pred_check
      _
    $region55: #{tpu_custom_call.1} parent=1 // pred_check_branch
      %517 = sbr.rel (0) target = $region57
    $region56: #{tpu_custom_call.1} parent=1 // pred_region
      %s519 = ssub.s32 256, 256
      %520 = vsyncadd [#allocation4], %s519
      %s521 = sshll.u32 [#allocation11], 4
      %s522 = int_to_ptr.vmem [resolvable:$true] %s521
      %527 = dma.vmem_to_hbm [thread:$0]  %s522, 256, %s8, [#allocation4], 128, 128, 8
    $region57: #{tpu_custom_call.1} parent=1 // pred_fallthru
      _
    // Predicated region
    $region58: #{tpu_custom_call.1} parent=1 // pred_check
      _
    $region59: #{tpu_custom_call.1} parent=1 // pred_check_branch
      %529 = sbr.rel (0) target = $region61
    $region60: #{tpu_custom_call.1} parent=1 // pred_region
      %530 = dma.done [#allocation4], 256
    $region61: #{tpu_custom_call.1} parent=1 // pred_fallthru
      _
    %531 = vsyncpa [#allocation3], 1
    %532 = vsyncpa [#allocation6], 1
    %533 = vsyncpa [#allocation9], 1
    %534 = vsyncpa [#allocation4], 1

</llo_original>
